<compile_context>
chip_gen: v7x
topology: tpu7x:2x2x1
jax: 0.10.0
libtpu: 0.0.40
codegen_flags: <defaults>
</compile_context>

<pallas_src>
import jax
import jax.numpy as jnp
from jax import lax
from jax.experimental import pallas as pl
from jax.experimental.pallas import tpu as pltpu

_INV_SQRT2 = 0.7071067811865476


def _round_up(x, m):
    return ((x + m - 1) // m) * m


def _mlp_kernel(x_ref, w1_ref, b1_ref, w2_ref, b2_ref, o_ref, acc_ref):
    # x_ref:  (tm, E)   token tile (native dtype)
    # w1_ref: (E, ti)   fc1 weight slab (transposed: in x out)
    # b1_ref: (1, ti)   fc1 bias slab
    # w2_ref: (ti, E)   fc2 weight slab
    # b2_ref: (1, E)    fc2 bias
    # o_ref:  (tm, E)   output tile
    # acc_ref:(tm, E)   f32 accumulator, resident across the I-reduction axis
    j = pl.program_id(1)

    @pl.when(j == 0)
    def _():
        acc_ref[...] = jnp.zeros_like(acc_ref)

    # fc1 partial: native-dtype MXU inputs, f32 accumulation.
    h = jnp.dot(x_ref[...], w1_ref[...], preferred_element_type=jnp.float32)
    h = h + b1_ref[...].astype(jnp.float32)

    # Exact GELU (PyTorch nn.GELU default): 0.5 * x * (1 + erf(x / sqrt(2)))
    h = 0.5 * h * (1.0 + lax.erf(h * jnp.float32(_INV_SQRT2)))

    # fc2 partial product for this I-slab; cast GELU output back to the MXU
    # input dtype (no-op for f32, bf16 fast path for bf16 weights).
    acc_ref[...] += jnp.dot(h.astype(w2_ref.dtype), w2_ref[...],
                            preferred_element_type=jnp.float32)

    @pl.when(j == pl.num_programs(1) - 1)
    def _():
        o_ref[...] = (acc_ref[...]
                      + b2_ref[...].astype(jnp.float32)).astype(o_ref.dtype)


def mlp_pallas(x, w1, b1, w2, b2, *, tm=256, ti=1024):
    """x: (M, E); w1: (E, I); b1: (I,); w2: (I, E); b2: (E,)."""
    M, E = x.shape
    E2, I = w1.shape
    assert E2 == E and w2.shape == (I, E) and b1.shape == (I,) and b2.shape == (E,)

    # --- tile selection -----------------------------------------------------
    # Intermediate tile must evenly divide I and stay 128-lane aligned; fall
    # back to the full dimension (always layout-legal) otherwise.
    if ti > I or I % ti != 0 or ti % 128 != 0:
        ti = I
    # Token tile: large enough to keep the MXU fed, clamped for small inputs.
    # Pad the token count to a multiple of the tile (padded rows sliced off).
    tm = min(tm, _round_up(M, 8))
    Mp = _round_up(M, tm)
    xp = x if Mp == M else jnp.pad(x, ((0, Mp - M), (0, 0)))

    b1r = b1.reshape(1, I)
    b2r = b2.reshape(1, E)

    grid = (Mp // tm, I // ti)
    itemsize = jnp.dtype(x.dtype).itemsize
    cost = pl.CostEstimate(
        flops=4 * Mp * E * I,                 # two matmuls, 2*M*E*I each
        transcendentals=Mp * I,               # erf over the intermediate
        bytes_accessed=(2 * Mp * E) * itemsize
        + grid[0] * (w1.size + w2.size + b1.size + b2.size) * itemsize,
    )

    out = pl.pallas_call(
        _mlp_kernel,
        out_shape=jax.ShapeDtypeStruct((Mp, E), x.dtype),
        grid_spec=pltpu.PrefetchScalarGridSpec(
            num_scalar_prefetch=0,
            grid=grid,
            in_specs=[
                pl.BlockSpec((tm, E), lambda i, j: (i, 0)),   # x tile
                pl.BlockSpec((E, ti), lambda i, j: (0, j)),   # fc1 weight slab
                pl.BlockSpec((1, ti), lambda i, j: (0, j)),   # fc1 bias slab
                pl.BlockSpec((ti, E), lambda i, j: (j, 0)),   # fc2 weight slab
                pl.BlockSpec((1, E), lambda i, j: (0, 0)),    # fc2 bias
            ],
            out_specs=pl.BlockSpec((tm, E), lambda i, j: (i, 0)),
            scratch_shapes=[pltpu.VMEM((tm, E), jnp.float32)],
        ),
        compiler_params=pltpu.CompilerParams(
            dimension_semantics=("parallel", "arbitrary"),
            vmem_limit_bytes=64 * 1024 * 1024,   # safe on v5e/v6e/v7x
        ),
        cost_estimate=cost,
    )(xp, w1, b1r, w2, b2r)

    return out[:M] if Mp != M else out


def mlp_forward(hidden_states, params, *, tm=256, ti=1024):
    """hidden_states: (B, S, E) -> (B, S, E), matching MLP.forward."""
    B, S, E = hidden_states.shape
    x = hidden_states.reshape(B * S, E)
    y = mlp_pallas(x, params["w1_t"], params["b1"], params["w2_t"], params["b2"],
                   tm=tm, ti=ti)
    return y.reshape(B, S, E)


def init_params(key, embed_dim, intermediate_dim=None, dtype=jnp.float32):
    if intermediate_dim is None:
        intermediate_dim = 4 * embed_dim
    k1, k2, k3, k4 = jax.random.split(key, 4)
    bound1 = 1.0 / (embed_dim ** 0.5)
    bound2 = 1.0 / (intermediate_dim ** 0.5)
    # PyTorch stores (out, in); we keep the transposed (in, out) layout.
    w1_t = jax.random.uniform(k1, (embed_dim, intermediate_dim), dtype, -bound1, bound1)
    b1 = jax.random.uniform(k2, (intermediate_dim,), dtype, -bound1, bound1)
    w2_t = jax.random.uniform(k3, (intermediate_dim, embed_dim), dtype, -bound2, bound2)
    b2 = jax.random.uniform(k4, (embed_dim,), dtype, -bound2, bound2)
    return {"w1_t": w1_t, "b1": b1, "w2_t": w2_t, "b2": b2}


def mlp_reference(hidden_states, params):
    h = hidden_states @ params["w1_t"] + params["b1"]
    h = jax.nn.gelu(h, approximate=False)
    return h @ params["w2_t"] + params["b2"]


if __name__ == "__main__":
    key = jax.random.PRNGKey(0)

    # Case 1: small shapes from the spec (B=2, S=8, E=32 -> I=128).
    k_x, k_p, key = jax.random.split(key, 3)
    B, S, E = 2, 8, 32
    x = jax.random.normal(k_x, (B, S, E), dtype=jnp.float32)
    params = init_params(k_p, E)
    out = jax.block_until_ready(mlp_forward(x, params))
    ref = mlp_reference(x, params)
    assert out.shape == (B, S, E)
    assert jnp.allclose(out, ref, atol=1e-5, rtol=1e-5)

    # Case 2: exercises the I-reduction grid axis and token padding
    # (M=20 -> padded to 24, I=512 split into 4 slabs of 128).
    k_x2, k_p2 = jax.random.split(key)
    B2, S2, E2 = 1, 20, 128
    x2 = jax.random.normal(k_x2, (B2, S2, E2), dtype=jnp.float32)
    params2 = init_params(k_p2, E2)            # intermediate = 512
    out2 = jax.block_until_ready(mlp_forward(x2, params2, ti=128))
    ref2 = mlp_reference(x2, params2)
    assert out2.shape == (B2, S2, E2)
    assert jnp.allclose(out2, ref2, atol=1e-4, rtol=1e-5)

    print("KERNEL_OK")
</pallas_src>

<mosaic_0001>
module attributes {stable_mosaic.version = 11 : i64} {
  func.func @_mlp_kernel(%arg0: i32, %arg1: i32, %arg2: memref<16x32xf32, #tpu.memory_space<vmem>>, %arg3: memref<32x128xf32, #tpu.memory_space<vmem>>, %arg4: memref<1x128xf32, #tpu.memory_space<vmem>>, %arg5: memref<128x32xf32, #tpu.memory_space<vmem>>, %arg6: memref<1x32xf32, #tpu.memory_space<vmem>>, %arg7: memref<16x32xf32, #tpu.memory_space<vmem>>, %arg8: memref<16x32xf32, #tpu.memory_space<vmem>>) attributes {dimension_semantics = [#tpu.dimension_semantics<parallel>, #tpu.dimension_semantics<arbitrary>], iteration_bounds = array<i64: 1, 1>, scalar_prefetch = 0 : i64, scratch_operands = 1 : i64, tpu.core_type = #tpu.core_type<tc>, window_params = [{transform_indices = @transform_0, window_bounds = array<i64: 16, 32>}, {transform_indices = @transform_1, window_bounds = array<i64: 32, 128>}, {transform_indices = @transform_2, window_bounds = array<i64: 1, 128>}, {transform_indices = @transform_3, window_bounds = array<i64: 128, 32>}, {pipeline_mode = #tpu.pipeline_mode<synchronous>, transform_indices = @transform_4, window_bounds = array<i64: 1, 32>}, {transform_indices = @transform_5, window_bounds = array<i64: 16, 32>}]} {
    %c0_i32 = arith.constant 0 : i32
    %0 = arith.cmpi eq, %arg1, %c0_i32 : i32
    %1 = arith.extui %0 : i1 to i32
    %c0_i32_0 = arith.constant 0 : i32
    %2 = arith.cmpi ne, %1, %c0_i32_0 : i32
    scf.if %2 {
      %cst_18 = arith.constant 0.000000e+00 : f32
      %25 = vector.broadcast %cst_18 : f32 to vector<16x32xf32>
      %c0_19 = arith.constant 0 : index
      %c0_20 = arith.constant 0 : index
      %26 = vector.load %arg8[%c0_19, %c0_20] : memref<16x32xf32, #tpu.memory_space<vmem>>, vector<16x32xf32>
      tpu.vector_store %arg8[%c0_19, %c0_20], %25 {strides = array<i32>} : memref<16x32xf32, #tpu.memory_space<vmem>>, vector<16x32xf32>,
    } else {
    }
    %c0 = arith.constant 0 : index
    %c0_1 = arith.constant 0 : index
    %3 = vector.load %arg2[%c0, %c0_1] : memref<16x32xf32, #tpu.memory_space<vmem>>, vector<16x32xf32>
    %c0_2 = arith.constant 0 : index
    %c0_3 = arith.constant 0 : index
    %4 = vector.load %arg3[%c0_2, %c0_3] : memref<32x128xf32, #tpu.memory_space<vmem>>, vector<32x128xf32>
    %cst = arith.constant dense<0.000000e+00> : vector<16x128xf32>
    %5 = tpu.matmul %3, %4, %cst {dimension_numbers = #tpu.dot_dimension_numbers<[1], [0], [0], [1], [0, 0, 1, 1], [], []>} : vector<16x32xf32>, vector<32x128xf32>, vector<16x128xf32> -> vector<16x128xf32>
    %c0_4 = arith.constant 0 : index
    %c0_5 = arith.constant 0 : index
    %6 = vector.load %arg4[%c0_4, %c0_5] : memref<1x128xf32, #tpu.memory_space<vmem>>, vector<1x128xf32>
    %7 = vector.broadcast %6 : vector<1x128xf32> to vector<16x128xf32>
    %8 = arith.addf %5, %7 : vector<16x128xf32>
    %cst_6 = arith.constant 5.000000e-01 : f32
    %9 = vector.broadcast %cst_6 : f32 to vector<16x128xf32>
    %10 = arith.mulf %9, %8 : vector<16x128xf32>
    %cst_7 = arith.constant 0.707106769 : f32
    %11 = vector.broadcast %cst_7 : f32 to vector<16x128xf32>
    %12 = arith.mulf %8, %11 : vector<16x128xf32>
    %13 = math.erf %12 : vector<16x128xf32>
    %cst_8 = arith.constant 1.000000e+00 : f32
    %14 = vector.broadcast %cst_8 : f32 to vector<16x128xf32>
    %15 = arith.addf %14, %13 : vector<16x128xf32>
    %16 = arith.mulf %10, %15 : vector<16x128xf32>
    %c0_9 = arith.constant 0 : index
    %c0_10 = arith.constant 0 : index
    %17 = vector.load %arg8[%c0_9, %c0_10] : memref<16x32xf32, #tpu.memory_space<vmem>>, vector<16x32xf32>
    %c0_11 = arith.constant 0 : index
    %c0_12 = arith.constant 0 : index
    %18 = vector.load %arg5[%c0_11, %c0_12] : memref<128x32xf32, #tpu.memory_space<vmem>>, vector<128x32xf32>
    %cst_13 = arith.constant dense<0.000000e+00> : vector<16x32xf32>
    %19 = tpu.matmul %16, %18, %cst_13 {dimension_numbers = #tpu.dot_dimension_numbers<[1], [0], [0], [1], [0, 0, 1, 1], [], []>} : vector<16x128xf32>, vector<128x32xf32>, vector<16x32xf32> -> vector<16x32xf32>
    %20 = arith.addf %17, %19 : vector<16x32xf32>
    %c0_14 = arith.constant 0 : index
    %c0_15 = arith.constant 0 : index
    %21 = vector.load %arg8[%c0_14, %c0_15] : memref<16x32xf32, #tpu.memory_space<vmem>>, vector<16x32xf32>
    tpu.vector_store %arg8[%c0_14, %c0_15], %20 {strides = array<i32>} : memref<16x32xf32, #tpu.memory_space<vmem>>, vector<16x32xf32>,
    %c0_i32_16 = arith.constant 0 : i32
    %22 = arith.cmpi eq, %arg1, %c0_i32_16 : i32
    %23 = arith.extui %22 : i1 to i32
    %c0_i32_17 = arith.constant 0 : i32
    %24 = arith.cmpi ne, %23, %c0_i32_17 : i32
    scf.if %24 {
      %c0_18 = arith.constant 0 : index
      %c0_19 = arith.constant 0 : index
      %25 = vector.load %arg8[%c0_18, %c0_19] : memref<16x32xf32, #tpu.memory_space<vmem>>, vector<16x32xf32>
      %c0_20 = arith.constant 0 : index
      %c0_21 = arith.constant 0 : index
      %26 = vector.load %arg6[%c0_20, %c0_21] : memref<1x32xf32, #tpu.memory_space<vmem>>, vector<1x32xf32>
      %27 = vector.broadcast %26 : vector<1x32xf32> to vector<16x32xf32>
      %28 = arith.addf %25, %27 : vector<16x32xf32>
      %c0_22 = arith.constant 0 : index
      %c0_23 = arith.constant 0 : index
      %29 = vector.load %arg7[%c0_22, %c0_23] : memref<16x32xf32, #tpu.memory_space<vmem>>, vector<16x32xf32>
      tpu.vector_store %arg7[%c0_22, %c0_23], %28 {strides = array<i32>} : memref<16x32xf32, #tpu.memory_space<vmem>>, vector<16x32xf32>,
    } else {
    }
    return
  }
  func.func @transform_0(%arg0: i32, %arg1: i32) -> (i32, i32) {
    %c0_i32 = arith.constant 0 : i32
    %c0_i32_0 = arith.constant 0 : i32
    return %arg0, %c0_i32 : i32, i32
  }
  func.func @transform_1(%arg0: i32, %arg1: i32) -> (i32, i32) {
    %c0_i32 = arith.constant 0 : i32
    %c0_i32_0 = arith.constant 0 : i32
    return %c0_i32, %arg1 : i32, i32
  }
  func.func @transform_2(%arg0: i32, %arg1: i32) -> (i32, i32) {
    %c0_i32 = arith.constant 0 : i32
    %c0_i32_0 = arith.constant 0 : i32
    return %c0_i32, %arg1 : i32, i32
  }
  func.func @transform_3(%arg0: i32, %arg1: i32) -> (i32, i32) {
    %c0_i32 = arith.constant 0 : i32
    %c0_i32_0 = arith.constant 0 : i32
    return %arg1, %c0_i32 : i32, i32
  }
  func.func @transform_4(%arg0: i32, %arg1: i32) -> (i32, i32) {
    %c0_i32 = arith.constant 0 : i32
    %c0_i32_0 = arith.constant 0 : i32
    %c0_i32_1 = arith.constant 0 : i32
    return %c0_i32, %c0_i32_0 : i32, i32
  }
  func.func @transform_5(%arg0: i32, %arg1: i32) -> (i32, i32) {
    %c0_i32 = arith.constant 0 : i32
    %c0_i32_0 = arith.constant 0 : i32
    return %arg0, %c0_i32 : i32, i32
  }
}

</mosaic_0001>

<llo_original>
// kernel: tpu_custom_call.1
$region0: #{tpu_custom_call.1}
  #allocation0 [shape = 'u32[]', space=smem, size = 0x4, offset = 0x4, fixed_abs, tag = 'smem constant byte address 0x4 - core index']
  #allocation1 [shape = 'u32[144,128]{1,0:T(1,128)}', space=vmem, size = 0x12000, scoped, tag = 'internal scratch']
  #allocation2 [shape = 'f32[16,32]{1,0:T(8,128)}', space=vmem, size = 0x2000, scoped, tag = 'scratch operand']
  %s0 = inlined_call_operand.hbm [shape: f32[16,32], index: 0, kind: input, shape index: {}]
  %s1 = inlined_call_operand.hbm [shape: f32[32,128], index: 1, kind: input, shape index: {}]
  %s2 = inlined_call_operand.hbm [shape: f32[1,128], index: 2, kind: input, shape index: {}]
  %s3 = inlined_call_operand.hbm [shape: f32[128,32], index: 3, kind: input, shape index: {}]
  %s4 = inlined_call_operand.hbm [shape: f32[1,32], index: 4, kind: input, shape index: {}]
  %s5 = inlined_call_operand.hbm [shape: f32[16,32], index: 5, kind: output, shape index: {}]
  %s6 = sld [smem:[#allocation0]]
  $region58: #{tpu_custom_call.1} parent=0
    _
  %s8 = ssub.s32 1, %s6
  %s9 = scalar_select 0, %s8, %s6
  $region1: #{tpu_custom_call.1} parent=0
    #allocation3 [shape = 'u8[8192]{0}', space=vmem, size = 0x2000, scoped, tag = 'input window, operand 0, single buffered']
    #allocation4 [shape = 's32[1]{0}', space=sflag, size = 0x4, scoped, tag = 'scoped memory for tpu_custom_call.1']
    #allocation5 [shape = 's32[1]{0}', space=sflag, size = 0x4, scoped, tag = 'scoped memory for tpu_custom_call.1']
    #allocation6 [shape = 'u8[16384]{0}', space=vmem, size = 0x4000, scoped, tag = 'input window, operand 1, single buffered']
    #allocation7 [shape = 's32[1]{0}', space=sflag, size = 0x4, scoped, tag = 'scoped memory for tpu_custom_call.1']
    #allocation8 [shape = 'u8[512]{0}', space=vmem, size = 0x400, scoped, tag = 'input window, operand 2, single buffered']
    #allocation9 [shape = 'u8[65536]{0}', space=vmem, size = 0x10000, scoped, tag = 'input window, operand 3, single buffered']
    #allocation10 [shape = 's32[1]{0}', space=sflag, size = 0x4, scoped, tag = 'scoped memory for tpu_custom_call.1']
    #allocation11 [shape = 'u8[512]{0}', space=vmem, size = 0x400, scoped, tag = 'input window, operand 4, single buffered']
    #allocation12 [shape = 'u8[8192]{0}', space=vmem, size = 0x2000, scoped, tag = 'output window, operand 0, single buffered']
    %10 = vsyncpa [#allocation4], 0
    %11 = vsyncpa [#allocation7], 0
    %12 = vsyncpa [#allocation10], 0
    %13 = vsyncpa [#allocation5], 0
    // Predicated region
    $region2: #{tpu_custom_call.1} parent=1 // pred_check
      _
    $region3: #{tpu_custom_call.1} parent=1 // pred_check_branch
      %15 = sbr.rel (0) target = $region5
    $region4: #{tpu_custom_call.1} parent=1 // pred_region
      %s17 = ssub.s32 256, 256
      %18 = vsyncadd [#allocation4], %s17
      %s19 = sshll.u32 [#allocation3], 4
      %s20 = int_to_ptr.vmem [resolvable:$true] %s19
      %25 = dma.hbm_to_vmem [thread:$0]  %s0, 256, %s20, [#allocation4], 128, 128, 8
    $region5: #{tpu_custom_call.1} parent=1 // pred_fallthru
      _
    // Predicated region
    $region6: #{tpu_custom_call.1} parent=1 // pred_check
      _
    $region7: #{tpu_custom_call.1} parent=1 // pred_check_branch
      %27 = sbr.rel (0) target = $region9
    $region8: #{tpu_custom_call.1} parent=1 // pred_region
      %s29 = ssub.s32 512, 512
      %30 = vsyncadd [#allocation7], %s29
      %s31 = sshll.u32 [#allocation6], 4
      %s32 = int_to_ptr.vmem [resolvable:$true] %s31
      %37 = dma.hbm_to_vmem [thread:$0]  %s1, 512, %s32, [#allocation7], 128, 128, 8
    $region9: #{tpu_custom_call.1} parent=1 // pred_fallthru
      _
    // Predicated region
    $region10: #{tpu_custom_call.1} parent=1 // pred_check
      _
    $region11: #{tpu_custom_call.1} parent=1 // pred_check_branch
      %39 = sbr.rel (0) target = $region13
    $region12: #{tpu_custom_call.1} parent=1 // pred_region
      %s41 = ssub.s32 16, 16
      %42 = vsyncadd [#allocation7], %s41
      %s44 = sshll.u32 [#allocation8], 4
      %s45 = int_to_ptr.vmem [resolvable:$true] %s44
      %47 = dma.hbm_to_vmem [thread:$0]  %s2, 16, %s45, [#allocation7]
    $region13: #{tpu_custom_call.1} parent=1 // pred_fallthru
      _
    // Predicated region
    $region14: #{tpu_custom_call.1} parent=1 // pred_check
      _
    $region15: #{tpu_custom_call.1} parent=1 // pred_check_branch
      %49 = sbr.rel (0) target = $region17
    $region16: #{tpu_custom_call.1} parent=1 // pred_region
      %s51 = ssub.s32 2048, 2048
      %52 = vsyncadd [#allocation10], %s51
      %s53 = sshll.u32 [#allocation9], 4
      %s54 = int_to_ptr.vmem [resolvable:$true] %s53
      %59 = dma.hbm_to_vmem [thread:$0]  %s3, 2048, %s54, [#allocation10], 128, 128, 8
    $region17: #{tpu_custom_call.1} parent=1 // pred_fallthru
      _
    // Predicated region
    $region18: #{tpu_custom_call.1} parent=1 // pred_check
      _
    $region19: #{tpu_custom_call.1} parent=1 // pred_check_branch
      %61 = sbr.rel (0) target = $region21
    $region20: #{tpu_custom_call.1} parent=1 // pred_region
      %s63 = ssub.s32 16, 16
      %64 = vsyncadd [#allocation10], %s63
      %s66 = sshll.u32 [#allocation11], 4
      %s67 = int_to_ptr.vmem [resolvable:$true] %s66
      %69 = dma.hbm_to_vmem [thread:$0]  %s4, 16, %s67, [#allocation10]
    $region21: #{tpu_custom_call.1} parent=1 // pred_fallthru
      _
    // Predicated region
    $region22: #{tpu_custom_call.1} parent=1 // pred_check
      _
    $region23: #{tpu_custom_call.1} parent=1 // pred_check_branch
      %71 = sbr.rel (0) target = $region25
    $region24: #{tpu_custom_call.1} parent=1 // pred_region
      %72 = dma.done [#allocation4], 256
    $region25: #{tpu_custom_call.1} parent=1 // pred_fallthru
      _
    // Predicated region
    $region26: #{tpu_custom_call.1} parent=1 // pred_check
      _
    $region27: #{tpu_custom_call.1} parent=1 // pred_check_branch
      %74 = sbr.rel (0) target = $region29
    $region28: #{tpu_custom_call.1} parent=1 // pred_region
      %75 = dma.done [#allocation7], 512
    $region29: #{tpu_custom_call.1} parent=1 // pred_fallthru
      _
    // Predicated region
    $region30: #{tpu_custom_call.1} parent=1 // pred_check
      _
    $region31: #{tpu_custom_call.1} parent=1 // pred_check_branch
      %77 = sbr.rel (0) target = $region33
    $region32: #{tpu_custom_call.1} parent=1 // pred_region
      %78 = dma.done [#allocation7], 16
    $region33: #{tpu_custom_call.1} parent=1 // pred_fallthru
      _
    // Predicated region
    $region34: #{tpu_custom_call.1} parent=1 // pred_check
      _
    $region35: #{tpu_custom_call.1} parent=1 // pred_check_branch
      %80 = sbr.rel (0) target = $region37
    $region36: #{tpu_custom_call.1} parent=1 // pred_region
      %81 = dma.done [#allocation10], 2048
    $region37: #{tpu_custom_call.1} parent=1 // pred_fallthru
      _
    // Predicated region
    $region38: #{tpu_custom_call.1} parent=1 // pred_check
      _
    $region39: #{tpu_custom_call.1} parent=1 // pred_check_branch
      %83 = sbr.rel (0) target = $region41
    $region40: #{tpu_custom_call.1} parent=1 // pred_region
      %84 = dma.done [#allocation10], 16
    $region41: #{tpu_custom_call.1} parent=1 // pred_fallthru
      _
    %p85 = scmp.eq.s32.totalorder 0, 0
    // Predicated region
    $region42: #{tpu_custom_call.1} parent=1 // pred_check
      %p86 = pneg %p85
    $region43: #{tpu_custom_call.1} parent=1 // pred_check_branch
      %88 = sbr.rel (%p86) target = $region45
    $region44: #{tpu_custom_call.1} parent=1 // pred_region
      %vm89 = vcmask 261120
      %90 = vst.msk [vmem:[#allocation2] sm:$0xff] %vm89, 0.0
      %91 = vst.msk [vmem:[#allocation2 + $0x8] sm:$0xff] %vm89, 0.0
    $region45: #{tpu_custom_call.1} parent=1 // pred_fallthru
      _
    %v92 = vld [vmem:[#allocation3] sm:$0xff]
    %v93 = vld [vmem:[#allocation3 + $0x8] sm:$0xff]
    %v94 = vld [vmem:[#allocation6] sm:$0xff]
    %v95 = vld [vmem:[#allocation6 + $0x8] sm:$0xff]
    %v96 = vld [vmem:[#allocation6 + $0x10] sm:$0xff]
    %v97 = vld [vmem:[#allocation6 + $0x18] sm:$0xff]
    %v98 = vld [vmem:[#allocation8] sm:$0x1]
    %v100 = vlaneseq
    %v101 = vshrl.u32 %v100, 7
    %v102 = vsub.s32 0, %v101
    %v103 = vrot.slane %v98, %v102
    %vm105 = vcmask 261120
    %v107 = vsel %vm105, %v92, 0
    %v110 = vsel %vm105, %v93, 0
    %112 = vmatprep.subr.mxu0 0.0
    %113 = vmatpush1.msra.mxu0 %v94
    %114 = vmatprep.subr.mxu0 0.0
    %115 = vmatpush1.msra.mxu0 %v95
    %116 = vmatprep.subr.mxu0 0.0
    %117 = vmatpush1.msra.mxu0 %v96
    %118 = vmatprep.subr.mxu0 0.0
    %119 = vmatpush1.msra.mxu0 %v97
    %120 = vmatprep.subr.mxu0 0.0
    %121 = vmatpush1.msra.mxu0 0.0
    %122 = vmatprep.subr.mxu0 0.0
    %123 = vmatpush1.msra.mxu0 0.0
    %124 = vmatprep.subr.mxu0 0.0
    %125 = vmatpush1.msra.mxu0 0.0
    %126 = vmatprep.subr.mxu0 0.0
    %127 = vmatpush1.msra.mxu0 0.0
    %128 = vmatprep.subr.mxu0 0.0
    %129 = vmatpush1.msra.mxu0 0.0
    %130 = vmatprep.subr.mxu0 0.0
    %131 = vmatpush1.msra.mxu0 0.0
    %132 = vmatprep.subr.mxu0 0.0
    %133 = vmatpush1.msra.mxu0 0.0
    %134 = vmatprep.subr.mxu0 0.0
    %135 = vmatpush1.msra.mxu0 0.0
    %136 = vmatprep.subr.mxu0 0.0
    %137 = vmatpush1.msra.mxu0 0.0
    %138 = vmatprep.subr.mxu0 0.0
    %139 = vmatpush1.msra.mxu0 0.0
    %140 = vmatprep.subr.mxu0 0.0
    %141 = vmatpush1.msra.mxu0 0.0
    %142 = vmatprep.subr.mxu0 0.0
    %143 = vmatpush1.msra.mxu0 0.0
    %144 = vmatprep.subr.mxu0 0.0
    %145 = vmatpush1.msra.mxu0 0.0
    %146 = vmatprep.subr.mxu0 0.0
    %147 = vmatpush1.msra.mxu0 0.0
    %148 = vmatprep.subr.mxu0 0.0
    %149 = vmatpush1.msra.mxu0 0.0
    %150 = vmatprep.subr.mxu0 0.0
    %151 = vmatpush1.msra.mxu0 0.0
    %152 = vmatprep.subr.mxu0 0.0
    %153 = vmatpush1.msra.mxu0 0.0
    %154 = vmatprep.subr.mxu0 0.0
    %155 = vmatpush1.msra.mxu0 0.0
    %156 = vmatprep.subr.mxu0 0.0
    %157 = vmatpush1.msra.mxu0 0.0
    %158 = vmatprep.subr.mxu0 0.0
    %159 = vmatpush1.msra.mxu0 0.0
    %160 = vmatprep.subr.mxu0 0.0
    %161 = vmatpush1.msra.mxu0 0.0
    %162 = vmatprep.subr.mxu0 0.0
    %163 = vmatpush1.msra.mxu0 0.0
    %164 = vmatprep.subr.mxu0 0.0
    %165 = vmatpush1.msra.mxu0 0.0
    %166 = vmatprep.subr.mxu0 0.0
    %167 = vmatpush1.msra.mxu0 0.0
    %168 = vmatprep.subr.mxu0 0.0
    %169 = vmatpush1.msra.mxu0 0.0
    %170 = vmatprep.subr.mxu0 0.0
    %171 = vmatpush1.msra.mxu0 0.0
    %172 = vmatprep.subr.mxu0 0.0
    %173 = vmatpush1.msra.mxu0 0.0
    %174 = vmatprep.subr.mxu0 0.0
    %175 = vmatpush1.msra.mxu0 0.0
    %176 = vmatprep.mubr.f32.mxu0 0.0
    %177 = vmatmul.mubr.f32.gmra.mrb[0].mxu0 %v107
    %v178 = vpop.f32.mrb[0].mxu0
    %v179 = vadd.f32 %v103, %v178
    %v180 = vpop.f32.mrb[0].mxu0
    %181 = vmatprep.mubr.f32.mxu0 0.0
    %182 = vmatmul.mubr.f32.gmra.mrb[0].mxu0 %v110
    %v183 = vpop.f32.mrb[0].mxu0
    %v184 = vadd.f32 %v103, %v183
    %v185 = vpop.f32.mrb[0].mxu0
    %186 = vdwg.mxu0
    %v187 = vmul.f32 %v179, 0.5
    %v188 = vmul.f32 %v184, 0.5
    %v189 = vmul.f32 %v179, 0.70710677
    %v190 = vmul.f32 %v184, 0.70710677
    %v191 = verf.f32.pop %v189
    %v192 = verf.f32.pop %v190
    %v193 = vadd.f32 %v191, 1.0
    %v194 = vadd.f32 %v192, 1.0
    %v195 = vmul.f32 %v187, %v193
    %v196 = vmul.f32 %v188, %v194
    %v197 = vld [vmem:[#allocation2] sm:$0xff]
    %v198 = vld [vmem:[#allocation2 + $0x8] sm:$0xff]
    %v199 = vld [vmem:[#allocation9] sm:$0xff]
    %v200 = vld [vmem:[#allocation9 + $0x8] sm:$0xff]
    %v201 = vld [vmem:[#allocation9 + $0x10] sm:$0xff]
    %v202 = vld [vmem:[#allocation9 + $0x18] sm:$0xff]
    %v203 = vld [vmem:[#allocation9 + $0x20] sm:$0xff]
    %v204 = vld [vmem:[#allocation9 + $0x28] sm:$0xff]
    %v205 = vld [vmem:[#allocation9 + $0x30] sm:$0xff]
    %v206 = vld [vmem:[#allocation9 + $0x38] sm:$0xff]
    %v207 = vld [vmem:[#allocation9 + $0x40] sm:$0xff]
    %v208 = vld [vmem:[#allocation9 + $0x48] sm:$0xff]
    %v209 = vld [vmem:[#allocation9 + $0x50] sm:$0xff]
    %v210 = vld [vmem:[#allocation9 + $0x58] sm:$0xff]
    %v211 = vld [vmem:[#allocation9 + $0x60] sm:$0xff]
    %v212 = vld [vmem:[#allocation9 + $0x68] sm:$0xff]
    %v213 = vld [vmem:[#allocation9 + $0x70] sm:$0xff]
    %v214 = vld [vmem:[#allocation9 + $0x78] sm:$0xff]
    %215 = vmatprep.subr.mxu0 0.0
    %216 = vmatpush1.msra.mxu0 %v199
    %217 = vmatprep.subr.mxu0 0.0
    %218 = vmatpush1.msra.mxu0 %v200
    %219 = vmatprep.subr.mxu0 0.0
    %220 = vmatpush1.msra.mxu0 %v201
    %221 = vmatprep.subr.mxu0 0.0
    %222 = vmatpush1.msra.mxu0 %v202
    %223 = vmatprep.subr.mxu0 0.0
    %224 = vmatpush1.msra.mxu0 %v203
    %225 = vmatprep.subr.mxu0 0.0
    %226 = vmatpush1.msra.mxu0 %v204
    %227 = vmatprep.subr.mxu0 0.0
    %228 = vmatpush1.msra.mxu0 %v205
    %229 = vmatprep.subr.mxu0 0.0
    %230 = vmatpush1.msra.mxu0 %v206
    %231 = vmatprep.subr.mxu0 0.0
    %232 = vmatpush1.msra.mxu0 %v207
    %233 = vmatprep.subr.mxu0 0.0
    %234 = vmatpush1.msra.mxu0 %v208
    %235 = vmatprep.subr.mxu0 0.0
    %236 = vmatpush1.msra.mxu0 %v209
    %237 = vmatprep.subr.mxu0 0.0
    %238 = vmatpush1.msra.mxu0 %v210
    %239 = vmatprep.subr.mxu0 0.0
    %240 = vmatpush1.msra.mxu0 %v211
    %241 = vmatprep.subr.mxu0 0.0
    %242 = vmatpush1.msra.mxu0 %v212
    %243 = vmatprep.subr.mxu0 0.0
    %244 = vmatpush1.msra.mxu0 %v213
    %245 = vmatprep.subr.mxu0 0.0
    %246 = vmatpush1.msra.mxu0 %v214
    %247 = vmatprep.subr.mxu0 0.0
    %248 = vmatpush1.msra.mxu0 0.0
    %249 = vmatprep.subr.mxu0 0.0
    %250 = vmatpush1.msra.mxu0 0.0
    %251 = vmatprep.subr.mxu0 0.0
    %252 = vmatpush1.msra.mxu0 0.0
    %253 = vmatprep.subr.mxu0 0.0
    %254 = vmatpush1.msra.mxu0 0.0
    %255 = vmatprep.subr.mxu0 0.0
    %256 = vmatpush1.msra.mxu0 0.0
    %257 = vmatprep.subr.mxu0 0.0
    %258 = vmatpush1.msra.mxu0 0.0
    %259 = vmatprep.subr.mxu0 0.0
    %260 = vmatpush1.msra.mxu0 0.0
    %261 = vmatprep.subr.mxu0 0.0
    %262 = vmatpush1.msra.mxu0 0.0
    %263 = vmatprep.subr.mxu0 0.0
    %264 = vmatpush1.msra.mxu0 0.0
    %265 = vmatprep.subr.mxu0 0.0
    %266 = vmatpush1.msra.mxu0 0.0
    %267 = vmatprep.subr.mxu0 0.0
    %268 = vmatpush1.msra.mxu0 0.0
    %269 = vmatprep.subr.mxu0 0.0
    %270 = vmatpush1.msra.mxu0 0.0
    %271 = vmatprep.subr.mxu0 0.0
    %272 = vmatpush1.msra.mxu0 0.0
    %273 = vmatprep.subr.mxu0 0.0
    %274 = vmatpush1.msra.mxu0 0.0
    %275 = vmatprep.subr.mxu0 0.0
    %276 = vmatpush1.msra.mxu0 0.0
    %277 = vmatprep.subr.mxu0 0.0
    %278 = vmatpush1.msra.mxu0 0.0
    %279 = vmatprep.mubr.f32.mxu0 0.0
    %280 = vmatmul.mubr.f32.gmra.mrb[0].mxu0 %v195
    %v281 = vpop.f32.mrb[0].mxu0
    %v282 = vadd.f32 0.0, %v281
    %v283 = vpop.f32.mrb[0].mxu0
    %284 = vmatprep.mubr.f32.mxu0 0.0
    %285 = vmatmul.mubr.f32.gmra.mrb[0].mxu0 %v196
    %v286 = vpop.f32.mrb[0].mxu0
    %v287 = vadd.f32 0.0, %v286
    %v288 = vpop.f32.mrb[0].mxu0
    %289 = vdwg.mxu0
    %v290 = vadd.f32 %v197, %v282
    %v291 = vadd.f32 %v198, %v287
    %292 = vst.msk [vmem:[#allocation2] sm:$0xff] %vm105, %v290
    %293 = vst.msk [vmem:[#allocation2 + $0x8] sm:$0xff] %vm105, %v291
    // Predicated region
    $region46: #{tpu_custom_call.1} parent=1 // pred_check
      %p294 = pneg %p85
    $region47: #{tpu_custom_call.1} parent=1 // pred_check_branch
      %296 = sbr.rel (%p294) target = $region49
    $region48: #{tpu_custom_call.1} parent=1 // pred_region
      %v297 = vld [vmem:[#allocation2] sm:$0xff]
      %v298 = vld [vmem:[#allocation2 + $0x8] sm:$0xff]
      %v299 = vld [vmem:[#allocation11] sm:$0x1]
      %v301 = vlaneseq
      %v302 = vshrl.u32 %v301, 7
      %v303 = vsub.s32 0, %v302
      %v304 = vrot.slane %v299, %v303
      %v306 = vadd.f32 %v297, %v304
      %v307 = vadd.f32 %v298, %v304
      %308 = vst.msk [vmem:[#allocation12] sm:$0xff] %vm105, %v306
      %309 = vst.msk [vmem:[#allocation12 + $0x8] sm:$0xff] %vm105, %v307
    $region49: #{tpu_custom_call.1} parent=1 // pred_fallthru
      _
    // Predicated region
    $region50: #{tpu_custom_call.1} parent=1 // pred_check
      _
    $region51: #{tpu_custom_call.1} parent=1 // pred_check_branch
      %311 = sbr.rel (0) target = $region53
    $region52: #{tpu_custom_call.1} parent=1 // pred_region
      %s313 = ssub.s32 256, 256
      %314 = vsyncadd [#allocation5], %s313
      %s315 = sshll.u32 [#allocation12], 4
      %s316 = int_to_ptr.vmem [resolvable:$true] %s315
      %321 = dma.vmem_to_hbm [thread:$0]  %s316, 256, %s5, [#allocation5], 128, 128, 8
    $region53: #{tpu_custom_call.1} parent=1 // pred_fallthru
      _
    // Predicated region
    $region54: #{tpu_custom_call.1} parent=1 // pred_check
      _
    $region55: #{tpu_custom_call.1} parent=1 // pred_check_branch
      %323 = sbr.rel (0) target = $region57
    $region56: #{tpu_custom_call.1} parent=1 // pred_region
      %324 = dma.done [#allocation5], 256
    $region57: #{tpu_custom_call.1} parent=1 // pred_fallthru
      _
    %325 = vsyncpa [#allocation4], 1
    %326 = vsyncpa [#allocation7], 1
    %327 = vsyncpa [#allocation10], 1
    %328 = vsyncpa [#allocation5], 1

</llo_original>
